<compile_context>
chip_gen: v5e
topology: v5e:2x2
jax: 0.10.0
libtpu: 0.0.40
codegen_flags: <defaults>
</compile_context>

<pallas_src>
import jax
import jax.numpy as jnp
from jax.experimental import pallas as pl
from jax.experimental.pallas import tpu as pltpu


LANE = 128            # lane-dense width for hidden layers / padded output
SUBLANE = 16          # bf16 sublane packing -> keep batch tiles a multiple of 16
DEFAULT_TILE_M = 1024  # batch-tile rows (big tiles amortize per-step overhead)


def _round_up(n, m):
    return ((n + m - 1) // m) * m


def _hidden_compute_dtype():
    """bf16 bias/ReLU on chips with bf16 VPU ALUs (v6e/v7x); f32 otherwise."""
    try:
        kind = jax.devices()[0].device_kind.lower()
    except Exception:
        return jnp.float32
    for old in ("v2", "v3", "v4", "v5"):
        if old in kind:
            return jnp.float32
    return jnp.bfloat16


# ----------------------------------------------------------------------------
# Kernel
# ----------------------------------------------------------------------------
def _dqn_kernel(x_ref,
                w1_ref, b1_ref,
                w2_ref, b2_ref,
                w3_ref, b3_ref,
                w4_ref, b4_ref,
                out_ref):
    """Fused forward: relu(relu(relu(x@W1+b1)@W2+b2)@W3+b3)@W4+b4.

    x and all weights arrive pre-cast to bf16 (MXU-native); matmuls accumulate
    in f32.  Bias-add + ReLU run in the dtype of the (pre-cast) biases: bf16 on
    v6e/v7x, f32 on v5e.  All hidden widths are pre-padded to 128 lanes, so
    every intermediate and the output block are lane-dense.
    """
    h = x_ref[...]                                   # bf16 batch tile
    for w_ref, b_ref in ((w1_ref, b1_ref), (w2_ref, b2_ref), (w3_ref, b3_ref)):
        acc = jnp.dot(h, w_ref[...], preferred_element_type=jnp.float32)
        h = jnp.maximum(acc.astype(b_ref.dtype) + b_ref[...], 0)
        h = h.astype(jnp.bfloat16)                   # next MXU operand
    acc = jnp.dot(h, w4_ref[...], preferred_element_type=jnp.float32)
    out_ref[...] = (acc + b4_ref[...]).astype(out_ref.dtype)


# ----------------------------------------------------------------------------
# One-time parameter preparation (call once, reuse for every forward)
# ----------------------------------------------------------------------------
def prepare_dqn_params(params, *, hidden_dtype=None):
    """Cast weights to bf16 and zero-pad all hidden/output widths to 128 lanes.

    params: dict with w1..w4 as (in, out) f32 and b1..b4 as (1, out) f32.
    Returns a dict of device arrays to be reused across forward calls.
    Zero-padding is numerically exact: padded ReLU lanes stay 0 and the
    matching padded input rows of the next weight are 0.
    """
    if hidden_dtype is None:
        hidden_dtype = _hidden_compute_dtype()

    w1, w2, w3, w4 = (params[f"w{i}"] for i in range(1, 5))
    b1, b2, b3, b4 = (params[f"b{i}"] for i in range(1, 5))
    assert max(w1.shape[1], w2.shape[1], w3.shape[1]) <= LANE, \
        "hidden widths must be <= 128 for lane padding"
    out_pad = _round_up(w4.shape[1], LANE)

    def pad_to(a, rows, cols):
        return jnp.pad(a, ((0, rows - a.shape[0]), (0, cols - a.shape[1])))

    return {
        "w1": pad_to(w1, w1.shape[0], LANE).astype(jnp.bfloat16),
        "b1": pad_to(b1, 1, LANE).astype(hidden_dtype),
        "w2": pad_to(w2, LANE, LANE).astype(jnp.bfloat16),
        "b2": pad_to(b2, 1, LANE).astype(hidden_dtype),
        "w3": pad_to(w3, LANE, LANE).astype(jnp.bfloat16),
        "b3": pad_to(b3, 1, LANE).astype(hidden_dtype),
        "w4": pad_to(w4, LANE, out_pad).astype(jnp.bfloat16),
        "b4": pad_to(b4, 1, out_pad).astype(jnp.float32),
    }


# ----------------------------------------------------------------------------
# Forward
# ----------------------------------------------------------------------------
def dqn_forward(x, prepared, *, outputs, tile_m=DEFAULT_TILE_M,
                out_dtype=jnp.float32):
    """Fused DQN forward as a single batch-tiled Pallas kernel.

    x: (batch, inputs) array (any float dtype; behaves like x.float() then
       bf16 MXU operands with f32 accumulation).
    prepared: output of prepare_dqn_params (call once, reuse).
    outputs: true (unpadded) output width to slice back to.
    Returns: (batch, outputs) array in out_dtype (default f32).
    """
    batch, inputs = x.shape
    out_pad = prepared["w4"].shape[1]

    # --- batch tiling --------------------------------------------------------
    full = _round_up(batch, SUBLANE)
    tile_m = min(_round_up(tile_m, SUBLANE), full)
    if full <= tile_m and full >= 2 * SUBLANE:
        # Single tile would cover the whole batch: split in two so both of
        # v7x's TensorCores get work (harmless on single-TC v5e/v6e).
        tile_m = _round_up(pl.cdiv(full, 2), SUBLANE)
    padded_batch = _round_up(full, tile_m)
    num_tiles = padded_batch // tile_m

    # One cast + (fused) pad; the kernel consumes bf16 directly.
    if padded_batch != batch:
        x = jnp.pad(x, ((0, padded_batch - batch), (0, 0)))
    x_bf16 = x.astype(jnp.bfloat16)

    # --- BlockSpecs (explicit named index_maps) ------------------------------
    def _row_tile(i):        # batch-tiled operands
        return (i, 0)

    def _resident(i):        # weights/biases: same block every step -> VMEM-resident
        return (0, 0)

    in_specs = [
        pl.BlockSpec((tile_m, inputs), _row_tile),
        pl.BlockSpec(prepared["w1"].shape, _resident),
        pl.BlockSpec(prepared["b1"].shape, _resident),
        pl.BlockSpec(prepared["w2"].shape, _resident),
        pl.BlockSpec(prepared["b2"].shape, _resident),
        pl.BlockSpec(prepared["w3"].shape, _resident),
        pl.BlockSpec(prepared["b3"].shape, _resident),
        pl.BlockSpec(prepared["w4"].shape, _resident),
        pl.BlockSpec(prepared["b4"].shape, _resident),
    ]
    out_spec = pl.BlockSpec((tile_m, out_pad), _row_tile)

    out_padded = pl.pallas_call(
        _dqn_kernel,
        out_shape=jax.ShapeDtypeStruct((padded_batch, out_pad), out_dtype),
        grid=(num_tiles,),
        in_specs=in_specs,
        out_specs=out_spec,
        compiler_params=pltpu.CompilerParams(
            dimension_semantics=("parallel",),      # megacore sharding on v7x
            vmem_limit_bytes=32 * 1024 * 1024,      # plenty; working set ~2-3 MiB
        ),
    )(x_bf16,
      prepared["w1"], prepared["b1"],
      prepared["w2"], prepared["b2"],
      prepared["w3"], prepared["b3"],
      prepared["w4"], prepared["b4"])

    return out_padded[:batch, :outputs]


# ----------------------------------------------------------------------------
# Init + pure-JAX reference
# ----------------------------------------------------------------------------
def init_dqn_params(key, inputs, outputs):
    """PyTorch nn.Linear-style init (uniform(-1/sqrt(fan_in), 1/sqrt(fan_in)));
    weights stored pre-transposed to (in, out) so the kernel does y = x @ W."""
    dims = [inputs, 32, 128, 16, outputs]
    params = {}
    for i in range(4):
        fan_in, fan_out = dims[i], dims[i + 1]
        key, kw, kb = jax.random.split(key, 3)
        bound = 1.0 / jnp.sqrt(jnp.float32(fan_in))
        params[f"w{i + 1}"] = jax.random.uniform(
            kw, (fan_in, fan_out), jnp.float32, -bound, bound)
        params[f"b{i + 1}"] = jax.random.uniform(
            kb, (1, fan_out), jnp.float32, -bound, bound)
    return params


def dqn_reference(x, params):
    """Pure-JAX f32 reference matching the PyTorch module's math."""
    h = x.astype(jnp.float32)
    for i in range(1, 4):
        h = jnp.maximum(h @ params[f"w{i}"] + params[f"b{i}"], 0.0)
    return h @ params["w4"] + params["b4"]


if __name__ == "__main__":
    key = jax.random.PRNGKey(0)
    key, kx1, kx2, kp = jax.random.split(key, 4)

    inputs, outputs = 8, 4
    params = init_dqn_params(kp, inputs, outputs)
    prepared = prepare_dqn_params(params)          # prepare ONCE, reuse

    # Small batch (single tile path).
    x1 = jax.random.normal(kx1, (2, inputs), jnp.float32)
    out1 = jax.block_until_ready(dqn_forward(x1, prepared, outputs=outputs))
    ref1 = dqn_reference(x1, params)
    assert out1.shape == (2, outputs)
    assert jnp.allclose(out1, ref1, atol=2e-2, rtol=2e-2), (out1, ref1)

    # Ragged batch (multi-tile path; padded rows are computed then discarded).
    x2 = jax.random.normal(kx2, (40, inputs), jnp.float32)
    out2 = jax.block_until_ready(dqn_forward(x2, prepared, outputs=outputs))
    ref2 = dqn_reference(x2, params)
    assert out2.shape == (40, outputs)
    # bf16 matmul operands (and bf16 bias/ReLU on v6e/v7x) -> loosened tolerance.
    assert jnp.allclose(out2, ref2, atol=2e-2, rtol=2e-2), (out2, ref2)

    print("KERNEL_OK")
</pallas_src>

<mosaic_0001>
module attributes {stable_mosaic.version = 11 : i64} {
  func.func @_dqn_kernel(%arg0: i32, %arg1: memref<16x8xbf16, #tpu.memory_space<vmem>>, %arg2: memref<8x128xbf16, #tpu.memory_space<vmem>>, %arg3: memref<1x128xbf16, #tpu.memory_space<vmem>>, %arg4: memref<128x128xbf16, #tpu.memory_space<vmem>>, %arg5: memref<1x128xbf16, #tpu.memory_space<vmem>>, %arg6: memref<128x128xbf16, #tpu.memory_space<vmem>>, %arg7: memref<1x128xbf16, #tpu.memory_space<vmem>>, %arg8: memref<128x128xbf16, #tpu.memory_space<vmem>>, %arg9: memref<1x128xf32, #tpu.memory_space<vmem>>, %arg10: memref<16x128xf32, #tpu.memory_space<vmem>>) attributes {dimension_semantics = [#tpu.dimension_semantics<parallel>], iteration_bounds = array<i64: 1>, scalar_prefetch = 0 : i64, scratch_operands = 0 : i64, tpu.core_type = #tpu.core_type<tc>, window_params = [{transform_indices = @transform_0, window_bounds = array<i64: 16, 8>}, {pipeline_mode = #tpu.pipeline_mode<synchronous>, transform_indices = @transform_1, window_bounds = array<i64: 8, 128>}, {pipeline_mode = #tpu.pipeline_mode<synchronous>, transform_indices = @transform_2, window_bounds = array<i64: 1, 128>}, {pipeline_mode = #tpu.pipeline_mode<synchronous>, transform_indices = @transform_3, window_bounds = array<i64: 128, 128>}, {pipeline_mode = #tpu.pipeline_mode<synchronous>, transform_indices = @transform_4, window_bounds = array<i64: 1, 128>}, {pipeline_mode = #tpu.pipeline_mode<synchronous>, transform_indices = @transform_5, window_bounds = array<i64: 128, 128>}, {pipeline_mode = #tpu.pipeline_mode<synchronous>, transform_indices = @transform_6, window_bounds = array<i64: 1, 128>}, {pipeline_mode = #tpu.pipeline_mode<synchronous>, transform_indices = @transform_7, window_bounds = array<i64: 128, 128>}, {pipeline_mode = #tpu.pipeline_mode<synchronous>, transform_indices = @transform_8, window_bounds = array<i64: 1, 128>}, {transform_indices = @transform_9, window_bounds = array<i64: 16, 128>}]} {
    %c0 = arith.constant 0 : index
    %c0_0 = arith.constant 0 : index
    %0 = vector.load %arg1[%c0, %c0_0] : memref<16x8xbf16, #tpu.memory_space<vmem>>, vector<16x8xbf16>
    %c0_1 = arith.constant 0 : index
    %c0_2 = arith.constant 0 : index
    %1 = vector.load %arg2[%c0_1, %c0_2] : memref<8x128xbf16, #tpu.memory_space<vmem>>, vector<8x128xbf16>
    %cst = arith.constant dense<0.000000e+00> : vector<16x128xf32>
    %2 = tpu.matmul %0, %1, %cst {dimension_numbers = #tpu.dot_dimension_numbers<[1], [0], [0], [1], [0, 0, 1, 1], [], []>} : vector<16x8xbf16>, vector<8x128xbf16>, vector<16x128xf32> -> vector<16x128xf32>
    %3 = arith.truncf %2 : vector<16x128xf32> to vector<16x128xbf16>
    %c0_3 = arith.constant 0 : index
    %c0_4 = arith.constant 0 : index
    %4 = vector.load %arg3[%c0_3, %c0_4] : memref<1x128xbf16, #tpu.memory_space<vmem>>, vector<1x128xbf16>
    %5 = vector.broadcast %4 : vector<1x128xbf16> to vector<16x128xbf16>
    %6 = arith.addf %3, %5 : vector<16x128xbf16>
    %cst_5 = arith.constant 0.000000e+00 : bf16
    %7 = vector.broadcast %cst_5 : bf16 to vector<16x128xbf16>
    %8 = arith.maximumf %6, %7 : vector<16x128xbf16>
    %c0_6 = arith.constant 0 : index
    %c0_7 = arith.constant 0 : index
    %9 = vector.load %arg4[%c0_6, %c0_7] : memref<128x128xbf16, #tpu.memory_space<vmem>>, vector<128x128xbf16>
    %cst_8 = arith.constant dense<0.000000e+00> : vector<16x128xf32>
    %10 = tpu.matmul %8, %9, %cst_8 {dimension_numbers = #tpu.dot_dimension_numbers<[1], [0], [0], [1], [0, 0, 1, 1], [], []>} : vector<16x128xbf16>, vector<128x128xbf16>, vector<16x128xf32> -> vector<16x128xf32>
    %11 = arith.truncf %10 : vector<16x128xf32> to vector<16x128xbf16>
    %c0_9 = arith.constant 0 : index
    %c0_10 = arith.constant 0 : index
    %12 = vector.load %arg5[%c0_9, %c0_10] : memref<1x128xbf16, #tpu.memory_space<vmem>>, vector<1x128xbf16>
    %13 = vector.broadcast %12 : vector<1x128xbf16> to vector<16x128xbf16>
    %14 = arith.addf %11, %13 : vector<16x128xbf16>
    %cst_11 = arith.constant 0.000000e+00 : bf16
    %15 = vector.broadcast %cst_11 : bf16 to vector<16x128xbf16>
    %16 = arith.maximumf %14, %15 : vector<16x128xbf16>
    %c0_12 = arith.constant 0 : index
    %c0_13 = arith.constant 0 : index
    %17 = vector.load %arg6[%c0_12, %c0_13] : memref<128x128xbf16, #tpu.memory_space<vmem>>, vector<128x128xbf16>
    %cst_14 = arith.constant dense<0.000000e+00> : vector<16x128xf32>
    %18 = tpu.matmul %16, %17, %cst_14 {dimension_numbers = #tpu.dot_dimension_numbers<[1], [0], [0], [1], [0, 0, 1, 1], [], []>} : vector<16x128xbf16>, vector<128x128xbf16>, vector<16x128xf32> -> vector<16x128xf32>
    %19 = arith.truncf %18 : vector<16x128xf32> to vector<16x128xbf16>
    %c0_15 = arith.constant 0 : index
    %c0_16 = arith.constant 0 : index
    %20 = vector.load %arg7[%c0_15, %c0_16] : memref<1x128xbf16, #tpu.memory_space<vmem>>, vector<1x128xbf16>
    %21 = vector.broadcast %20 : vector<1x128xbf16> to vector<16x128xbf16>
    %22 = arith.addf %19, %21 : vector<16x128xbf16>
    %cst_17 = arith.constant 0.000000e+00 : bf16
    %23 = vector.broadcast %cst_17 : bf16 to vector<16x128xbf16>
    %24 = arith.maximumf %22, %23 : vector<16x128xbf16>
    %c0_18 = arith.constant 0 : index
    %c0_19 = arith.constant 0 : index
    %25 = vector.load %arg8[%c0_18, %c0_19] : memref<128x128xbf16, #tpu.memory_space<vmem>>, vector<128x128xbf16>
    %cst_20 = arith.constant dense<0.000000e+00> : vector<16x128xf32>
    %26 = tpu.matmul %24, %25, %cst_20 {dimension_numbers = #tpu.dot_dimension_numbers<[1], [0], [0], [1], [0, 0, 1, 1], [], []>} : vector<16x128xbf16>, vector<128x128xbf16>, vector<16x128xf32> -> vector<16x128xf32>
    %c0_21 = arith.constant 0 : index
    %c0_22 = arith.constant 0 : index
    %27 = vector.load %arg9[%c0_21, %c0_22] : memref<1x128xf32, #tpu.memory_space<vmem>>, vector<1x128xf32>
    %28 = vector.broadcast %27 : vector<1x128xf32> to vector<16x128xf32>
    %29 = arith.addf %26, %28 : vector<16x128xf32>
    %c0_23 = arith.constant 0 : index
    %c0_24 = arith.constant 0 : index
    %30 = vector.load %arg10[%c0_23, %c0_24] : memref<16x128xf32, #tpu.memory_space<vmem>>, vector<16x128xf32>
    tpu.vector_store %arg10[%c0_23, %c0_24], %29 {strides = array<i32>} : memref<16x128xf32, #tpu.memory_space<vmem>>, vector<16x128xf32>,
    return
  }
  func.func @transform_0(%arg0: i32) -> (i32, i32) {
    %c0_i32 = arith.constant 0 : i32
    %c0_i32_0 = arith.constant 0 : i32
    return %arg0, %c0_i32 : i32, i32
  }
  func.func @transform_1(%arg0: i32) -> (i32, i32) {
    %c0_i32 = arith.constant 0 : i32
    %c0_i32_0 = arith.constant 0 : i32
    %c0_i32_1 = arith.constant 0 : i32
    return %c0_i32, %c0_i32_0 : i32, i32
  }
  func.func @transform_2(%arg0: i32) -> (i32, i32) {
    %c0_i32 = arith.constant 0 : i32
    %c0_i32_0 = arith.constant 0 : i32
    %c0_i32_1 = arith.constant 0 : i32
    return %c0_i32, %c0_i32_0 : i32, i32
  }
  func.func @transform_3(%arg0: i32) -> (i32, i32) {
    %c0_i32 = arith.constant 0 : i32
    %c0_i32_0 = arith.constant 0 : i32
    %c0_i32_1 = arith.constant 0 : i32
    return %c0_i32, %c0_i32_0 : i32, i32
  }
  func.func @transform_4(%arg0: i32) -> (i32, i32) {
    %c0_i32 = arith.constant 0 : i32
    %c0_i32_0 = arith.constant 0 : i32
    %c0_i32_1 = arith.constant 0 : i32
    return %c0_i32, %c0_i32_0 : i32, i32
  }
  func.func @transform_5(%arg0: i32) -> (i32, i32) {
    %c0_i32 = arith.constant 0 : i32
    %c0_i32_0 = arith.constant 0 : i32
    %c0_i32_1 = arith.constant 0 : i32
    return %c0_i32, %c0_i32_0 : i32, i32
  }
  func.func @transform_6(%arg0: i32) -> (i32, i32) {
    %c0_i32 = arith.constant 0 : i32
    %c0_i32_0 = arith.constant 0 : i32
    %c0_i32_1 = arith.constant 0 : i32
    return %c0_i32, %c0_i32_0 : i32, i32
  }
  func.func @transform_7(%arg0: i32) -> (i32, i32) {
    %c0_i32 = arith.constant 0 : i32
    %c0_i32_0 = arith.constant 0 : i32
    %c0_i32_1 = arith.constant 0 : i32
    return %c0_i32, %c0_i32_0 : i32, i32
  }
  func.func @transform_8(%arg0: i32) -> (i32, i32) {
    %c0_i32 = arith.constant 0 : i32
    %c0_i32_0 = arith.constant 0 : i32
    %c0_i32_1 = arith.constant 0 : i32
    return %c0_i32, %c0_i32_0 : i32, i32
  }
  func.func @transform_9(%arg0: i32) -> (i32, i32) {
    %c0_i32 = arith.constant 0 : i32
    %c0_i32_0 = arith.constant 0 : i32
    return %arg0, %c0_i32 : i32, i32
  }
}

</mosaic_0001>

<llo_original>
// kernel: tpu_custom_call.1
$region0: #{tpu_custom_call.1}
  #allocation0 [shape = 'u32[]', space=smem, size = 0x4, offset = 0x4, fixed_abs, tag = 'smem constant byte address 0x4 - core index']
  #allocation1 [shape = 'u32[72,128]{1,0:T(1,128)}', space=vmem, size = 0x9000, scoped, tag = 'internal scratch']
  %s0 = inlined_call_operand.vmem [shape: bf16[16,8], index: 0, kind: input, shape index: {}]
  %s1 = inlined_call_operand.vmem [shape: bf16[8,128], index: 1, kind: input, shape index: {}]
  %s2 = inlined_call_operand.vmem [shape: bf16[1,128], index: 2, kind: input, shape index: {}]
  %s3 = inlined_call_operand.hbm [shape: bf16[128,128], index: 3, kind: input, shape index: {}]
  %s4 = inlined_call_operand.vmem [shape: bf16[1,128], index: 4, kind: input, shape index: {}]
  %s5 = inlined_call_operand.hbm [shape: bf16[128,128], index: 5, kind: input, shape index: {}]
  %s6 = inlined_call_operand.vmem [shape: bf16[1,128], index: 6, kind: input, shape index: {}]
  %s7 = inlined_call_operand.hbm [shape: bf16[128,128], index: 7, kind: input, shape index: {}]
  %s8 = inlined_call_operand.vmem [shape: f32[1,128], index: 8, kind: input, shape index: {}]
  %s9 = inlined_call_operand.hbm [shape: f32[16,128], index: 9, kind: output, shape index: {}]
  %s10 = sld [smem:[#allocation0]]
  $region58: #{tpu_custom_call.1} parent=0
    _
  %s12 = ssub.s32 1, %s10
  %s13 = scalar_select 0, %s12, %s10
  $region1: #{tpu_custom_call.1} parent=0
    #allocation2 [shape = 'u8[32768]{0}', space=vmem, size = 0x8000, scoped, tag = 'input window, operand 3, single buffered']
    #allocation3 [shape = 's32[1]{0}', space=sflag, size = 0x4, scoped, tag = 'scoped memory for tpu_custom_call.1']
    #allocation4 [shape = 's32[1]{0}', space=sflag, size = 0x4, scoped, tag = 'scoped memory for tpu_custom_call.1']
    #allocation5 [shape = 'u8[32768]{0}', space=vmem, size = 0x8000, scoped, tag = 'input window, operand 5, single buffered']
    #allocation6 [shape = 's32[1]{0}', space=sflag, size = 0x4, scoped, tag = 'scoped memory for tpu_custom_call.1']
    #allocation7 [shape = 'u8[32768]{0}', space=vmem, size = 0x8000, scoped, tag = 'input window, operand 7, single buffered']
    #allocation8 [shape = 'u8[8192]{0}', space=vmem, size = 0x2000, scoped, tag = 'output window, operand 0, single buffered']
    %14 = vsyncpa [#allocation3], 0
    %15 = vsyncpa [#allocation6], 0
    %16 = vsyncpa [#allocation4], 0
    // Predicated region
    $region2: #{tpu_custom_call.1} parent=1 // pred_check
      _
    $region3: #{tpu_custom_call.1} parent=1 // pred_check_branch
      %18 = sbr.rel (0) target = $region5
    $region4: #{tpu_custom_call.1} parent=1 // pred_region
      _
    $region5: #{tpu_custom_call.1} parent=1 // pred_fallthru
      _
    // Predicated region
    $region6: #{tpu_custom_call.1} parent=1 // pred_check
      _
    $region7: #{tpu_custom_call.1} parent=1 // pred_check_branch
      %20 = sbr.rel (0) target = $region9
    $region8: #{tpu_custom_call.1} parent=1 // pred_region
      _
    $region9: #{tpu_custom_call.1} parent=1 // pred_fallthru
      _
    // Predicated region
    $region10: #{tpu_custom_call.1} parent=1 // pred_check
      _
    $region11: #{tpu_custom_call.1} parent=1 // pred_check_branch
      %22 = sbr.rel (0) target = $region13
    $region12: #{tpu_custom_call.1} parent=1 // pred_region
      _
    $region13: #{tpu_custom_call.1} parent=1 // pred_fallthru
      _
    // Predicated region
    $region14: #{tpu_custom_call.1} parent=1 // pred_check
      _
    $region15: #{tpu_custom_call.1} parent=1 // pred_check_branch
      %24 = sbr.rel (0) target = $region17
    $region16: #{tpu_custom_call.1} parent=1 // pred_region
      %26 = vsyncadd [#allocation3], 0
      %s27 = sshll.u32 %s3, 4
      %s28 = int_to_ptr.hbm [resolvable:$true] %s27
      %s29 = sshll.u32 [#allocation2], 4
      %s30 = int_to_ptr.vmem [resolvable:$true] %s29
      %35 = dma.hbm_to_vmem [thread:$0]  %s28, 1024, %s30, [#allocation3], 64, 64, 4
    $region17: #{tpu_custom_call.1} parent=1 // pred_fallthru
      _
    // Predicated region
    $region18: #{tpu_custom_call.1} parent=1 // pred_check
      _
    $region19: #{tpu_custom_call.1} parent=1 // pred_check_branch
      %37 = sbr.rel (0) target = $region21
    $region20: #{tpu_custom_call.1} parent=1 // pred_region
      _
    $region21: #{tpu_custom_call.1} parent=1 // pred_fallthru
      _
    // Predicated region
    $region22: #{tpu_custom_call.1} parent=1 // pred_check
      _
    $region23: #{tpu_custom_call.1} parent=1 // pred_check_branch
      %39 = sbr.rel (0) target = $region25
    $region24: #{tpu_custom_call.1} parent=1 // pred_region
      %41 = vsyncadd [#allocation6], 0
      %s42 = sshll.u32 %s5, 4
      %s43 = int_to_ptr.hbm [resolvable:$true] %s42
      %s44 = sshll.u32 [#allocation5], 4
      %s45 = int_to_ptr.vmem [resolvable:$true] %s44
      %50 = dma.hbm_to_vmem [thread:$0]  %s43, 1024, %s45, [#allocation6], 64, 64, 4
    $region25: #{tpu_custom_call.1} parent=1 // pred_fallthru
      _
    // Predicated region
    $region26: #{tpu_custom_call.1} parent=1 // pred_check
      _
    $region27: #{tpu_custom_call.1} parent=1 // pred_check_branch
      %52 = sbr.rel (0) target = $region29
    $region28: #{tpu_custom_call.1} parent=1 // pred_region
      _
    $region29: #{tpu_custom_call.1} parent=1 // pred_fallthru
      _
    // Predicated region
    $region30: #{tpu_custom_call.1} parent=1 // pred_check
      _
    $region31: #{tpu_custom_call.1} parent=1 // pred_check_branch
      %54 = sbr.rel (0) target = $region33
    $region32: #{tpu_custom_call.1} parent=1 // pred_region
      %56 = vsyncadd [#allocation6], 0
      %s57 = sshll.u32 %s7, 4
      %s58 = int_to_ptr.hbm [resolvable:$true] %s57
      %s59 = sshll.u32 [#allocation7], 4
      %s60 = int_to_ptr.vmem [resolvable:$true] %s59
      %65 = dma.hbm_to_vmem [thread:$0]  %s58, 1024, %s60, [#allocation6], 64, 64, 4
    $region33: #{tpu_custom_call.1} parent=1 // pred_fallthru
      _
    // Predicated region
    $region34: #{tpu_custom_call.1} parent=1 // pred_check
      _
    $region35: #{tpu_custom_call.1} parent=1 // pred_check_branch
      %67 = sbr.rel (0) target = $region37
    $region36: #{tpu_custom_call.1} parent=1 // pred_region
      _
    $region37: #{tpu_custom_call.1} parent=1 // pred_fallthru
      _
    // Predicated region
    $region38: #{tpu_custom_call.1} parent=1 // pred_check
      _
    $region39: #{tpu_custom_call.1} parent=1 // pred_check_branch
      %69 = sbr.rel (0) target = $region41
    $region40: #{tpu_custom_call.1} parent=1 // pred_region
      %71 = dma.done [#allocation3], 1024
    $region41: #{tpu_custom_call.1} parent=1 // pred_fallthru
      _
    // Predicated region
    $region42: #{tpu_custom_call.1} parent=1 // pred_check
      _
    $region43: #{tpu_custom_call.1} parent=1 // pred_check_branch
      %73 = sbr.rel (0) target = $region45
    $region44: #{tpu_custom_call.1} parent=1 // pred_region
      %75 = dma.done [#allocation6], 1024
    $region45: #{tpu_custom_call.1} parent=1 // pred_fallthru
      _
    // Predicated region
    $region46: #{tpu_custom_call.1} parent=1 // pred_check
      _
    $region47: #{tpu_custom_call.1} parent=1 // pred_check_branch
      %77 = sbr.rel (0) target = $region49
    $region48: #{tpu_custom_call.1} parent=1 // pred_region
      %79 = dma.done [#allocation6], 1024
    $region49: #{tpu_custom_call.1} parent=1 // pred_fallthru
      _
    %v81 = vld [vmem:[%s0] sm:$0xf]
    %v82 = vld [vmem:[%s0 + $0x4] sm:$0xf]
    %v83 = vld [vmem:[%s1] sm:$0xf]
    %v86 = vunpack.c.l.b16 %v81
    %v87 = vunpack.c.l.b16 %v82
    %v88 = vpack.c.b16 %v87, %v86
    %vm89 = vcmask 64512
    %v91 = vsel %vm89, %v88, 0
    %vm93 = vcmask 1043456
    %v95 = vsel %vm93, %v83, 0
    %97 = vmatpush.bf16.msra.mxu0 0
    %98 = vmatpush.bf16.msra.mxu0 0
    %99 = vmatpush.bf16.msra.mxu0 0
    %100 = vmatpush.bf16.msra.mxu0 0
    %101 = vmatpush.bf16.msra.mxu0 0
    %102 = vmatpush.bf16.msra.mxu0 0
    %103 = vmatpush.bf16.msra.mxu0 0
    %104 = vmatpush.bf16.msra.mxu0 %v95
    %105 = vmatmul.bf16.gmra.mxu0 %v91
    %v106 = vpop.f32.mrf.mxu0
    %v107 = vadd.f32 0.0, %v106
    %v108 = vpop.f32.mrf.mxu0
    %v109 = vadd.f32 0.0, %v108
    %110 = vdwg.mxu0
    %v111 = vpack.c.bf16 %v107, %v107
    %v112 = vpack.c.bf16 %v109, %v109
    %v113 = vld [vmem:[%s2] sm:$0x1]
    %v115 = vpack.i.b16 %v113, %v113
    %v117 = vperm.slane %v115, 0
    %v118 = vunpack.c.l.bf16 %v111
    %v119 = vunpack.c.l.bf16 %v112
    %v120 = vunpack.c.l.bf16 %v117
    %v121 = vadd.f32 %v118, %v120
    %v122 = vadd.f32 %v119, %v120
    %v123 = vpack.c.bf16 %v121, %v121
    %v124 = vpack.c.bf16 %v122, %v122
    %v125 = vunpack.c.l.bf16 %v123
    %v126 = vunpack.c.l.bf16 %v124
    %v127 = vmax.f32 %v125, 0.0
    %v128 = vmax.f32 %v126, 0.0
    %v129 = vpack.c.bf16 %v128, %v127
    %v130 = vld [vmem:[#allocation2] sm:$0xf]
    %v131 = vld [vmem:[#allocation2 + $0x4] sm:$0xf]
    %v132 = vld [vmem:[#allocation2 + $0x8] sm:$0xf]
    %v133 = vld [vmem:[#allocation2 + $0xc] sm:$0xf]
    %v134 = vld [vmem:[#allocation2 + $0x10] sm:$0xf]
    %v135 = vld [vmem:[#allocation2 + $0x14] sm:$0xf]
    %v136 = vld [vmem:[#allocation2 + $0x18] sm:$0xf]
    %v137 = vld [vmem:[#allocation2 + $0x1c] sm:$0xf]
    %v138 = vld [vmem:[#allocation2 + $0x20] sm:$0xf]
    %v139 = vld [vmem:[#allocation2 + $0x24] sm:$0xf]
    %v140 = vld [vmem:[#allocation2 + $0x28] sm:$0xf]
    %v141 = vld [vmem:[#allocation2 + $0x2c] sm:$0xf]
    %v142 = vld [vmem:[#allocation2 + $0x30] sm:$0xf]
    %v143 = vld [vmem:[#allocation2 + $0x34] sm:$0xf]
    %v144 = vld [vmem:[#allocation2 + $0x38] sm:$0xf]
    %v145 = vld [vmem:[#allocation2 + $0x3c] sm:$0xf]
    %v162 = vunpack.c.l.b16 %v130
    %v163 = vunpack.c.l.b16 %v131
    %v164 = vunpack.c.l.b16 %v132
    %v165 = vunpack.c.l.b16 %v133
    %v166 = vunpack.c.l.b16 %v134
    %v167 = vunpack.c.l.b16 %v135
    %v168 = vunpack.c.l.b16 %v136
    %v169 = vunpack.c.l.b16 %v137
    %v170 = vunpack.c.l.b16 %v138
    %v171 = vunpack.c.l.b16 %v139
    %v172 = vunpack.c.l.b16 %v140
    %v173 = vunpack.c.l.b16 %v141
    %v174 = vunpack.c.l.b16 %v142
    %v175 = vunpack.c.l.b16 %v143
    %v176 = vunpack.c.l.b16 %v144
    %v177 = vunpack.c.l.b16 %v145
    %v178 = vpack.c.b16 %v163, %v162
    %v179 = vpack.c.b16 %v165, %v164
    %v180 = vpack.c.b16 %v167, %v166
    %v181 = vpack.c.b16 %v169, %v168
    %v182 = vpack.c.b16 %v171, %v170
    %v183 = vpack.c.b16 %v173, %v172
    %v184 = vpack.c.b16 %v175, %v174
    %v185 = vpack.c.b16 %v177, %v176
    %194 = vmatpush.bf16.msra.mxu0 %v185
    %195 = vmatpush.bf16.msra.mxu0 %v184
    %196 = vmatpush.bf16.msra.mxu0 %v183
    %197 = vmatpush.bf16.msra.mxu0 %v182
    %198 = vmatpush.bf16.msra.mxu0 %v181
    %199 = vmatpush.bf16.msra.mxu0 %v180
    %200 = vmatpush.bf16.msra.mxu0 %v179
    %201 = vmatpush.bf16.msra.mxu0 %v178
    %202 = vmatmul.bf16.gmra.mxu0 %v129
    %v203 = vpop.f32.mrf.mxu0
    %v204 = vadd.f32 0.0, %v203
    %v205 = vpop.f32.mrf.mxu0
    %v206 = vadd.f32 0.0, %v205
    %207 = vdwg.mxu0
    %v208 = vpack.c.bf16 %v204, %v204
    %v209 = vpack.c.bf16 %v206, %v206
    %v210 = vld [vmem:[%s4] sm:$0x1]
    %v212 = vpack.i.b16 %v210, %v210
    %v214 = vperm.slane %v212, 0
    %v215 = vunpack.c.l.bf16 %v208
    %v216 = vunpack.c.l.bf16 %v209
    %v217 = vunpack.c.l.bf16 %v214
    %v218 = vadd.f32 %v215, %v217
    %v219 = vadd.f32 %v216, %v217
    %v220 = vpack.c.bf16 %v218, %v218
    %v221 = vpack.c.bf16 %v219, %v219
    %v222 = vunpack.c.l.bf16 %v220
    %v223 = vunpack.c.l.bf16 %v221
    %v224 = vmax.f32 %v222, 0.0
    %v225 = vmax.f32 %v223, 0.0
    %v226 = vpack.c.bf16 %v225, %v224
    %v227 = vld [vmem:[#allocation5] sm:$0xf]
    %v228 = vld [vmem:[#allocation5 + $0x4] sm:$0xf]
    %v229 = vld [vmem:[#allocation5 + $0x8] sm:$0xf]
    %v230 = vld [vmem:[#allocation5 + $0xc] sm:$0xf]
    %v231 = vld [vmem:[#allocation5 + $0x10] sm:$0xf]
    %v232 = vld [vmem:[#allocation5 + $0x14] sm:$0xf]
    %v233 = vld [vmem:[#allocation5 + $0x18] sm:$0xf]
    %v234 = vld [vmem:[#allocation5 + $0x1c] sm:$0xf]
    %v235 = vld [vmem:[#allocation5 + $0x20] sm:$0xf]
    %v236 = vld [vmem:[#allocation5 + $0x24] sm:$0xf]
    %v237 = vld [vmem:[#allocation5 + $0x28] sm:$0xf]
    %v238 = vld [vmem:[#allocation5 + $0x2c] sm:$0xf]
    %v239 = vld [vmem:[#allocation5 + $0x30] sm:$0xf]
    %v240 = vld [vmem:[#allocation5 + $0x34] sm:$0xf]
    %v241 = vld [vmem:[#allocation5 + $0x38] sm:$0xf]
    %v242 = vld [vmem:[#allocation5 + $0x3c] sm:$0xf]
    %v259 = vunpack.c.l.b16 %v227
    %v260 = vunpack.c.l.b16 %v228
    %v261 = vunpack.c.l.b16 %v229
    %v262 = vunpack.c.l.b16 %v230
    %v263 = vunpack.c.l.b16 %v231
    %v264 = vunpack.c.l.b16 %v232
    %v265 = vunpack.c.l.b16 %v233
    %v266 = vunpack.c.l.b16 %v234
    %v267 = vunpack.c.l.b16 %v235
    %v268 = vunpack.c.l.b16 %v236
    %v269 = vunpack.c.l.b16 %v237
    %v270 = vunpack.c.l.b16 %v238
    %v271 = vunpack.c.l.b16 %v239
    %v272 = vunpack.c.l.b16 %v240
    %v273 = vunpack.c.l.b16 %v241
    %v274 = vunpack.c.l.b16 %v242
    %v275 = vpack.c.b16 %v260, %v259
    %v276 = vpack.c.b16 %v262, %v261
    %v277 = vpack.c.b16 %v264, %v263
    %v278 = vpack.c.b16 %v266, %v265
    %v279 = vpack.c.b16 %v268, %v267
    %v280 = vpack.c.b16 %v270, %v269
    %v281 = vpack.c.b16 %v272, %v271
    %v282 = vpack.c.b16 %v274, %v273
    %291 = vmatpush.bf16.msra.mxu0 %v282
    %292 = vmatpush.bf16.msra.mxu0 %v281
    %293 = vmatpush.bf16.msra.mxu0 %v280
    %294 = vmatpush.bf16.msra.mxu0 %v279
    %295 = vmatpush.bf16.msra.mxu0 %v278
    %296 = vmatpush.bf16.msra.mxu0 %v277
    %297 = vmatpush.bf16.msra.mxu0 %v276
    %298 = vmatpush.bf16.msra.mxu0 %v275
    %299 = vmatmul.bf16.gmra.mxu0 %v226
    %v300 = vpop.f32.mrf.mxu0
    %v301 = vadd.f32 0.0, %v300
    %v302 = vpop.f32.mrf.mxu0
    %v303 = vadd.f32 0.0, %v302
    %304 = vdwg.mxu0
    %v305 = vpack.c.bf16 %v301, %v301
    %v306 = vpack.c.bf16 %v303, %v303
    %v307 = vld [vmem:[%s6] sm:$0x1]
    %v309 = vpack.i.b16 %v307, %v307
    %v311 = vperm.slane %v309, 0
    %v312 = vunpack.c.l.bf16 %v305
    %v313 = vunpack.c.l.bf16 %v306
    %v314 = vunpack.c.l.bf16 %v311
    %v315 = vadd.f32 %v312, %v314
    %v316 = vadd.f32 %v313, %v314
    %v317 = vpack.c.bf16 %v315, %v315
    %v318 = vpack.c.bf16 %v316, %v316
    %v319 = vunpack.c.l.bf16 %v317
    %v320 = vunpack.c.l.bf16 %v318
    %v321 = vmax.f32 %v319, 0.0
    %v322 = vmax.f32 %v320, 0.0
    %v323 = vpack.c.bf16 %v322, %v321
    %v324 = vld [vmem:[#allocation7] sm:$0xf]
    %v325 = vld [vmem:[#allocation7 + $0x4] sm:$0xf]
    %v326 = vld [vmem:[#allocation7 + $0x8] sm:$0xf]
    %v327 = vld [vmem:[#allocation7 + $0xc] sm:$0xf]
    %v328 = vld [vmem:[#allocation7 + $0x10] sm:$0xf]
    %v329 = vld [vmem:[#allocation7 + $0x14] sm:$0xf]
    %v330 = vld [vmem:[#allocation7 + $0x18] sm:$0xf]
    %v331 = vld [vmem:[#allocation7 + $0x1c] sm:$0xf]
    %v332 = vld [vmem:[#allocation7 + $0x20] sm:$0xf]
    %v333 = vld [vmem:[#allocation7 + $0x24] sm:$0xf]
    %v334 = vld [vmem:[#allocation7 + $0x28] sm:$0xf]
    %v335 = vld [vmem:[#allocation7 + $0x2c] sm:$0xf]
    %v336 = vld [vmem:[#allocation7 + $0x30] sm:$0xf]
    %v337 = vld [vmem:[#allocation7 + $0x34] sm:$0xf]
    %v338 = vld [vmem:[#allocation7 + $0x38] sm:$0xf]
    %v339 = vld [vmem:[#allocation7 + $0x3c] sm:$0xf]
    %v340 = vld [vmem:[%s8] sm:$0x1]
    %v342 = vperm.slane %v340, 0
    %v360 = vunpack.c.l.b16 %v324
    %v361 = vunpack.c.l.b16 %v325
    %v362 = vunpack.c.l.b16 %v326
    %v363 = vunpack.c.l.b16 %v327
    %v364 = vunpack.c.l.b16 %v328
    %v365 = vunpack.c.l.b16 %v329
    %v366 = vunpack.c.l.b16 %v330
    %v367 = vunpack.c.l.b16 %v331
    %v368 = vunpack.c.l.b16 %v332
    %v369 = vunpack.c.l.b16 %v333
    %v370 = vunpack.c.l.b16 %v334
    %v371 = vunpack.c.l.b16 %v335
    %v372 = vunpack.c.l.b16 %v336
    %v373 = vunpack.c.l.b16 %v337
    %v374 = vunpack.c.l.b16 %v338
    %v375 = vunpack.c.l.b16 %v339
    %v376 = vpack.c.b16 %v361, %v360
    %v377 = vpack.c.b16 %v363, %v362
    %v378 = vpack.c.b16 %v365, %v364
    %v379 = vpack.c.b16 %v367, %v366
    %v380 = vpack.c.b16 %v369, %v368
    %v381 = vpack.c.b16 %v371, %v370
    %v382 = vpack.c.b16 %v373, %v372
    %v383 = vpack.c.b16 %v375, %v374
    %392 = vmatpush.bf16.msra.mxu0 %v383
    %393 = vmatpush.bf16.msra.mxu0 %v382
    %394 = vmatpush.bf16.msra.mxu0 %v381
    %395 = vmatpush.bf16.msra.mxu0 %v380
    %396 = vmatpush.bf16.msra.mxu0 %v379
    %397 = vmatpush.bf16.msra.mxu0 %v378
    %398 = vmatpush.bf16.msra.mxu0 %v377
    %399 = vmatpush.bf16.msra.mxu0 %v376
    %400 = vmatmul.bf16.gmra.mxu0 %v323
    %v401 = vpop.f32.mrf.mxu0
    %v402 = vadd.f32 %v342, %v401
    %v403 = vpop.f32.mrf.mxu0
    %v404 = vadd.f32 %v342, %v403
    %405 = vdwg.mxu0
    %406 = vst [vmem:[#allocation8] sm:$0xff] %v402
    %407 = vst [vmem:[#allocation8 + $0x8] sm:$0xff] %v404
    // Predicated region
    $region50: #{tpu_custom_call.1} parent=1 // pred_check
      _
    $region51: #{tpu_custom_call.1} parent=1 // pred_check_branch
      %409 = sbr.rel (0) target = $region53
    $region52: #{tpu_custom_call.1} parent=1 // pred_region
      %411 = vsyncadd [#allocation4], 0
      %s412 = sshll.u32 [#allocation8], 4
      %s413 = int_to_ptr.vmem [resolvable:$true] %s412
      %s414 = sshll.u32 %s9, 4
      %s415 = int_to_ptr.hbm [resolvable:$true] %s414
      %420 = dma.vmem_to_hbm [thread:$0]  %s413, 256, %s415, [#allocation4], 128, 128, 8
    $region53: #{tpu_custom_call.1} parent=1 // pred_fallthru
      _
    // Predicated region
    $region54: #{tpu_custom_call.1} parent=1 // pred_check
      _
    $region55: #{tpu_custom_call.1} parent=1 // pred_check_branch
      %422 = sbr.rel (0) target = $region57
    $region56: #{tpu_custom_call.1} parent=1 // pred_region
      %424 = dma.done [#allocation4], 256
    $region57: #{tpu_custom_call.1} parent=1 // pred_fallthru
      _
    %425 = vsyncpa [#allocation3], 1
    %426 = vsyncpa [#allocation6], 1
    %427 = vsyncpa [#allocation4], 1

</llo_original>
